<compile_context>
chip_gen: v6e
topology: v6e:2x2x1
jax: 0.10.0
libtpu: 0.0.40
codegen_flags: <defaults>
</compile_context>

<pallas_src>
from functools import partial

import jax
import jax.numpy as jnp
from jax.experimental import pallas as pl
from jax.experimental.pallas import tpu as pltpu


def _finer_kernel(x_ref, o_ref, *, omega_0):
    # Upcast to f32 for the phase computation; store back in the I/O dtype.
    x = x_ref[...].astype(jnp.float32)
    scale = jnp.abs(x) + 1.0                     # generate_scale(x) (no_grad in torch)
    o_ref[...] = jnp.sin(omega_0 * scale * x).astype(o_ref.dtype)


# Candidate lane widths (all multiples of 128, widest first).
_WIDTHS = (4096, 2048, 1024, 512, 256, 128)

# ~2 MiB blocks: on the roofline plateau; 4 live blocks fit v5e's 16 MiB
# scoped-VMEM default with headroom.
_TARGET_BLOCK_BYTES = 2 * 1024 * 1024


def _run_2d(x2d, omega_0):
    rows, W = x2d.shape
    itemsize = jnp.dtype(x2d.dtype).itemsize

    if rows <= 8:
        tm = rows                                # whole (tiny) array in one block
    else:
        # Round tm down to a multiple of 8 (sublane tiling); clamp to rows.
        tm = (_TARGET_BLOCK_BYTES // (W * itemsize)) // 8 * 8
        tm = max(8, min(tm, rows))

    grid = (pl.cdiv(rows, tm),)                  # Pallas masks the partial tail block

    return pl.pallas_call(
        partial(_finer_kernel, omega_0=float(omega_0)),
        out_shape=jax.ShapeDtypeStruct((rows, W), x2d.dtype),
        grid=grid,
        in_specs=[pl.BlockSpec((tm, W), lambda i: (i, 0))],
        out_specs=pl.BlockSpec((tm, W), lambda i: (i, 0)),
        compiler_params=pltpu.CompilerParams(
            dimension_semantics=("parallel",),   # megacore / v7x 2-TC sharding
        ),
    )(x2d)


def finer_activation(x, omega_0=30.0):
    """Pallas implementation of FinerActivation.forward."""
    orig_shape = x.shape
    total = x.size

    if total == 0:
        return x

    # Lane-dense layout: pick the widest last dim that exactly divides the
    # element count so the reshape is a free contiguous view (no padding).
    W = next((w for w in _WIDTHS if total % w == 0), None)

    if W is not None:
        x2d = x.reshape(total // W, W)
        out = _run_2d(x2d, omega_0)
        return out.reshape(orig_shape)

    # Ragged fallback (element count not a multiple of 128): pad the flat view
    # up to the next 128 multiple and slice afterwards. Extra HBM passes, but
    # only for awkward sizes.
    pad = (-total) % 128
    x_flat = jnp.pad(x.reshape(-1), (0, pad))
    padded = total + pad
    Wp = next(w for w in _WIDTHS if padded % w == 0)
    out = _run_2d(x_flat.reshape(padded // Wp, Wp), omega_0)
    return out.reshape(-1)[:total].reshape(orig_shape)


if __name__ == "__main__":
    key = jax.random.PRNGKey(0)
    # SIREN/FINER-style MLP activation input: (batch, points, hidden)
    x = jax.random.normal(key, (2, 8, 32), dtype=jnp.float32)

    out = jax.block_until_ready(finer_activation(x, omega_0=30.0))

    # reference check (plain JAX, same math)
    ref = jnp.sin(30.0 * (jnp.abs(x) + 1.0) * x)
    assert out.shape == x.shape and out.dtype == x.dtype
    assert jnp.allclose(out, ref, atol=1e-5, rtol=1e-5)

    print("KERNEL_OK")
</pallas_src>

<mosaic_0001>
module attributes {stable_mosaic.version = 11 : i64} {
  func.func @_finer_kernel(%arg0: i32, %arg1: memref<1x512xf32, #tpu.memory_space<vmem>>, %arg2: memref<1x512xf32, #tpu.memory_space<vmem>>) attributes {dimension_semantics = [#tpu.dimension_semantics<parallel>], iteration_bounds = array<i64: 1>, scalar_prefetch = 0 : i64, scratch_operands = 0 : i64, tpu.core_type = #tpu.core_type<tc>, window_params = [{transform_indices = @transform_0, window_bounds = array<i64: 1, 512>}, {transform_indices = @transform_1, window_bounds = array<i64: 1, 512>}]} {
    %c0 = arith.constant 0 : index
    %c0_0 = arith.constant 0 : index
    %0 = vector.load %arg1[%c0, %c0_0] : memref<1x512xf32, #tpu.memory_space<vmem>>, vector<1x512xf32>
    %1 = math.absf %0 : vector<1x512xf32>
    %cst = arith.constant 1.000000e+00 : f32
    %2 = vector.broadcast %cst : f32 to vector<1x512xf32>
    %3 = arith.addf %1, %2 : vector<1x512xf32>
    %cst_1 = arith.constant 3.000000e+01 : f32
    %4 = vector.broadcast %cst_1 : f32 to vector<1x512xf32>
    %5 = arith.mulf %4, %3 : vector<1x512xf32>
    %6 = arith.mulf %5, %0 : vector<1x512xf32>
    %7 = math.sin %6 : vector<1x512xf32>
    %c0_2 = arith.constant 0 : index
    %c0_3 = arith.constant 0 : index
    %8 = vector.load %arg2[%c0_2, %c0_3] : memref<1x512xf32, #tpu.memory_space<vmem>>, vector<1x512xf32>
    tpu.vector_store %arg2[%c0_2, %c0_3], %7 {strides = array<i32>} : memref<1x512xf32, #tpu.memory_space<vmem>>, vector<1x512xf32>,
    return
  }
  func.func @transform_0(%arg0: i32) -> (i32, i32) {
    %c0_i32 = arith.constant 0 : i32
    %c0_i32_0 = arith.constant 0 : i32
    return %arg0, %c0_i32 : i32, i32
  }
  func.func @transform_1(%arg0: i32) -> (i32, i32) {
    %c0_i32 = arith.constant 0 : i32
    %c0_i32_0 = arith.constant 0 : i32
    return %arg0, %c0_i32 : i32, i32
  }
}

</mosaic_0001>

<llo_original>
// kernel: tpu_custom_call.1
$region0: #{tpu_custom_call.1}
  #allocation0 [shape = 'u32[]', space=smem, size = 0x4, offset = 0x4, fixed_abs, tag = 'smem constant byte address 0x4 - core index']
  #allocation1 [shape = 'u32[144,128]{1,0:T(1,128)}', space=vmem, size = 0x12000, scoped, tag = 'internal scratch']
  %s0 = inlined_call_operand.hbm [shape: f32[1,512], index: 0, kind: input, shape index: {}]
  %s1 = inlined_call_operand.hbm [shape: f32[1,512], index: 1, kind: output, shape index: {}]
  %s2 = sld [smem:[#allocation0]]
  $region18: #{tpu_custom_call.1} parent=0
    _
  %s4 = ssub.s32 1, %s2
  %s5 = scalar_select 0, %s4, %s2
  $region1: #{tpu_custom_call.1} parent=0
    #allocation2 [shape = 'u8[2048]{0}', space=vmem, size = 0x800, scoped, tag = 'input window, operand 0, single buffered']
    #allocation3 [shape = 's32[1]{0}', space=sflag, size = 0x4, scoped, tag = 'scoped memory for tpu_custom_call.1']
    #allocation4 [shape = 's32[1]{0}', space=sflag, size = 0x4, scoped, tag = 'scoped memory for tpu_custom_call.1']
    #allocation5 [shape = 'u8[2048]{0}', space=vmem, size = 0x800, scoped, tag = 'output window, operand 0, single buffered']
    %6 = vsyncpa [#allocation3], 0
    %7 = vsyncpa [#allocation4], 0
    // Predicated region
    $region2: #{tpu_custom_call.1} parent=1 // pred_check
      _
    $region3: #{tpu_custom_call.1} parent=1 // pred_check_branch
      %9 = sbr.rel (0) target = $region5
    $region4: #{tpu_custom_call.1} parent=1 // pred_region
      %s11 = ssub.s32 64, 64
      %12 = vsyncadd [#allocation3], %s11
      %s14 = sshll.u32 [#allocation2], 4
      %s15 = int_to_ptr.vmem [resolvable:$true] %s14
      %17 = dma.hbm_to_vmem [thread:$0]  %s0, 64, %s15, [#allocation3]
    $region5: #{tpu_custom_call.1} parent=1 // pred_fallthru
      _
    // Predicated region
    $region6: #{tpu_custom_call.1} parent=1 // pred_check
      _
    $region7: #{tpu_custom_call.1} parent=1 // pred_check_branch
      %19 = sbr.rel (0) target = $region9
    $region8: #{tpu_custom_call.1} parent=1 // pred_region
      %20 = dma.done [#allocation3], 64
    $region9: #{tpu_custom_call.1} parent=1 // pred_fallthru
      _
    %v21 = vld [vmem:[#allocation2] sm:$0xf]
    %v22 = vand.u32 2147483647, %v21
    %v23 = vadd.f32 %v22, 1.0
    %v24 = vmul.f32 %v23, 30.0
    %v25 = vmul.f32 %v24, %v21
    %v26 = vand.u32 2147483647, %v25
    %vm27 = vcmp.le.f32.partialorder %v26, 0.7853982
    %vm28 = vcmp.lt.s32.totalorder %v25, 0
    %v29 = vand.u32 %v25, 2139095040
    %v30 = vshrl.u32 %v29, 23
    %v31 = vsub.s32 %v30, 127
    %v32 = vand.u32 2147483647, %v25
    %v33 = vand.u32 %v32, 8388607
    %v34 = vor.u32 %v33, 8388608
    %v35 = vsub.s32 0, %v34
    %v36 = vadd.s32 %v31, 1
    %vm37 = vcmp.gt.s32.totalorder %v36, 0
    %v38 = vsel %vm37, %v36, 0
    %v39 = vshrl.u32 %v38, 5
    %v40 = vand.u32 %v38, 31
    %v41 = vsub.s32 32, %v40
    %v42 = vshrl.u32 683565275, %v41
    %v43 = vshll.u32 683565275, %v40
    %v44 = vshrl.u32 2475754826, %v41
    %v45 = vor.u32 %v43, %v44
    %v46 = vshll.u32 2475754826, %v40
    %v47 = vshrl.u32 2131351028, %v41
    %v48 = vor.u32 %v46, %v47
    %v49 = vshll.u32 2131351028, %v40
    %v50 = vshrl.u32 2102212464, %v41
    %v51 = vor.u32 %v49, %v50
    %v52 = vshll.u32 2102212464, %v40
    %v53 = vshrl.u32 920167782, %v41
    %v54 = vor.u32 %v52, %v53
    %v55 = vshll.u32 920167782, %v40
    %v56 = vshrl.u32 1326507024, %v41
    %v57 = vor.u32 %v55, %v56
    %vm58 = vcmp.lt.s32.totalorder %v39, 1
    %vm59 = vcmp.lt.s32.totalorder %v39, 2
    %vm60 = vcmp.lt.s32.totalorder %v39, 3
    %vm61 = vcmp.lt.s32.totalorder %v39, 4
    %v62 = vsel %vm58, %v42, %v45
    %v63 = vsel %vm61, %v51, 2102212464
    %v64 = vsel %vm60, %v48, %v63
    %v65 = vsel %vm59, %v62, %v64
    %v66 = vsel %vm58, %v45, %v48
    %v67 = vsel %vm61, %v54, 920167782
    %v68 = vsel %vm60, %v51, %v67
    %v69 = vsel %vm59, %v66, %v68
    %v70 = vsel %vm58, %v48, %v51
    %v71 = vsel %vm61, %v57, 1326507024
    %v72 = vsel %vm60, %v54, %v71
    %v73 = vsel %vm59, %v70, %v72
    %v74 = vshll.u32 %v34, 8
    %v75 = vmul.u32.u64.compose %v74, %v73
    %v76 = vextract.low.u32 %v75
    %v77 = vextract.high.u32 %v75
    %v78 = vmul.u32.u64.compose %v74, %v69
    %v79 = vextract.low.u32 %v78
    %v80 = vextract.high.u32 %v78
    %v81 = vmul.u32 %v74, %v65
    %v82 = vadd.s32 %v77, %v79
    %vm83 = vc.u32 %v77, %v79
    %v84 = vadd.s32 %v80, 1
    %v85 = vsel %vm83, %v84, %v80
    %v86 = vadd.s32 %v81, %v85
    %v87 = vadd.s32 %v86, 536870912
    %v88 = vshrl.u32 %v87, 30
    %v89 = vshll.u32 %v88, 30
    %v90 = vsub.s32 %v86, %v89
    %vm91 = vcmp.lt.s32.totalorder %v90, 0
    %v92 = vsub.s32 0, %v90
    %v93 = vsel %vm91, %v92, %v90
    %v94 = vclz %v93
    %v95 = vsub.s32 %v94, 2
    %vm96 = vcmp.gt.s32.totalorder 0, %v95
    %v97 = vsel %vm96, 0, %v95
    %v98 = vsub.s32 32, %v97
    %v99 = vshll.u32 %v90, %v97
    %v100 = vshrl.u32 %v82, %v98
    %v101 = vor.u32 %v99, %v100
    %v102 = vsub.s32 4294967266, %v97
    %v103 = vadd.s32 %v102, 127
    %v104 = vshll.u32 %v103, 23
    %v105 = vor.u32 4788187, %v104
    %v106 = vand.u32 2147483647, %v105
    %v108 = vcvt.s32.f32 %v101
    %v109 = vmul.f32 %v108, %v106
    %v110 = vxor.u32 %v109, 2147483648
    %v111 = vsel %vm28, %v110, %v109
    %v112 = vsub.s32 4, %v88
    %v113 = vsel %vm28, %v112, %v88
    %v114 = vsel %vm27, %v25, %v111
    %v115 = vsel %vm27, 0, %v113
    %v116 = vcosq.f32.pop %v114
    %v117 = vsinq.f32.pop %v114
    %vm118 = vweird.f32 %v25
    %v119 = vadd.s32 %v115, 3
    %v120 = vand.u32 %v119, 3
    %vm121 = vcmp.lt.s32.totalorder %v120, 2
    %vm122 = vcmp.eq.s32.totalorder %v120, 0
    %v123 = vxor.u32 %v117, 2147483648
    %v124 = vsel %vm122, %v116, %v123
    %vm125 = vcmp.eq.s32.totalorder %v120, 2
    %v126 = vxor.u32 %v116, 2147483648
    %v127 = vsel %vm125, %v126, %v117
    %v128 = vsel %vm121, %v124, %v127
    %v129 = vsel %vm118, nan, %v128
    %v130 = vlaneseq
    %vm131 = vcmp.ge.s32.totalorder %v130, 0
    %vm132 = vcmp.lt.s32.totalorder %v130, 512
    %vm133 = vmand %vm131, %vm132
    %134 = vst.msk [vmem:[#allocation5] sm:$0xf] %vm133, %v129
    // Predicated region
    $region10: #{tpu_custom_call.1} parent=1 // pred_check
      _
    $region11: #{tpu_custom_call.1} parent=1 // pred_check_branch
      %136 = sbr.rel (0) target = $region13
    $region12: #{tpu_custom_call.1} parent=1 // pred_region
      %s138 = ssub.s32 64, 64
      %139 = vsyncadd [#allocation4], %s138
      %s141 = sshll.u32 [#allocation5], 4
      %s142 = int_to_ptr.vmem [resolvable:$true] %s141
      %144 = dma.vmem_to_hbm [thread:$0]  %s142, 64, %s1, [#allocation4]
    $region13: #{tpu_custom_call.1} parent=1 // pred_fallthru
      _
    // Predicated region
    $region14: #{tpu_custom_call.1} parent=1 // pred_check
      _
    $region15: #{tpu_custom_call.1} parent=1 // pred_check_branch
      %146 = sbr.rel (0) target = $region17
    $region16: #{tpu_custom_call.1} parent=1 // pred_region
      %147 = dma.done [#allocation4], 64
    $region17: #{tpu_custom_call.1} parent=1 // pred_fallthru
      _
    %148 = vsyncpa [#allocation3], 1
    %149 = vsyncpa [#allocation4], 1

</llo_original>
